<compile_context>
chip_gen: v6e
topology: v6e:2x2x1
jax: 0.10.0
libtpu: 0.0.40
codegen_flags: <defaults>
</compile_context>

<pallas_src>
import jax
import jax.numpy as jnp
from jax import lax
from jax.experimental import pallas as pl
from jax.experimental.pallas import tpu as pltpu


def _vq_kernel(x_ref, cbt_ref, cb_ref, c2h_ref, idx_ref, q_ref):
    """One (tm, Dp) row tile of x against the full (resident) codebook."""
    x = x_ref[...]                           # (tm, Dp) f32
    cbt = cbt_ref[...]                       # (Dp, Kp) distance dtype (bf16 default)

    # x . c^T on the MXU in canonical (tm, Dp) @ (Dp, Kp) form -- no transpose.
    xc = jnp.dot(x.astype(cbt.dtype), cbt,
                 preferred_element_type=jnp.float32)          # (tm, Kp)

    # argmin ||x - c||^2  ==  argmin( 0.5*||c||^2 - x.c )  (scale folded in wrapper).
    d = c2h_ref[...] - xc                                     # (tm, Kp)
    idx = jnp.argmin(d, axis=-1).astype(jnp.int32)            # (tm,)
    idx_ref[...] = idx[None, :]                               # (1, tm) lane-dense store

    # Exact gather: one-hot @ codebook on the MXU (sums exactly one 1.0*row).
    cb = cb_ref[...]                                          # (Kp, Dp) gather dtype
    tm, kp = d.shape
    onehot = (lax.broadcasted_iota(jnp.int32, (tm, kp), 1)
              == idx[:, None]).astype(cb.dtype)               # (tm, Kp)
    q_ref[...] = jnp.dot(onehot, cb,
                         preferred_element_type=jnp.float32).astype(q_ref.dtype)


def _round_up(v, m):
    return ((v + m - 1) // m) * m


def vector_quantize(x, codebook, *, tm=256, matmul_dtype=jnp.bfloat16,
                    gather_dtype=None):
    """x: (..., D) float, codebook: (K, D) float.

    Returns (indices int32 of shape x.shape[:-1], quantized float32 of x.shape).
    matmul_dtype: operand dtype of the distance matmul (default bf16 for the
        bf16-native MXU; None -> f32, bit-exact argmin vs. the f32 reference).
    gather_dtype: operand dtype of the one-hot gather matmul (None -> f32 exact;
        bf16 rounds the quantized values, acceptable in many VQ-VAE loops).
    """
    *lead, D = x.shape
    K, Dc = codebook.shape
    assert D == Dc, "feature dim mismatch between x and codebook"

    x2d = x.reshape(-1, D).astype(jnp.float32)
    cb_f32 = codebook.astype(jnp.float32)
    M = x2d.shape[0]

    # Pad the feature dim to a lane multiple (exact) and the codebook rows to a
    # 128 multiple (padded rows get huge half-norms so they never win argmin).
    Dp = max(128, _round_up(D, 128))
    Kp = max(128, _round_up(K, 128))
    if Dp != D:
        x2d = jnp.pad(x2d, ((0, 0), (0, Dp - D)))
        cb_p = jnp.pad(cb_f32, ((0, 0), (0, Dp - D)))
    else:
        cb_p = cb_f32
    c2h = 0.5 * jnp.sum(cb_p * cb_p, axis=-1)                  # (K,)
    if Kp != K:
        cb_p = jnp.pad(cb_p, ((0, Kp - K), (0, 0)))
        c2h = jnp.concatenate([c2h, jnp.full((Kp - K,), 1e30, jnp.float32)])
    c2h = c2h[None, :]                                         # (1, Kp)

    mm_dtype = jnp.float32 if matmul_dtype is None else matmul_dtype
    g_dtype = jnp.float32 if gather_dtype is None else gather_dtype
    cbt = cb_p.T.astype(mm_dtype)          # (Dp, Kp) distance operand (pre-transposed)
    cbg = cb_p.astype(g_dtype)             # (Kp, Dp) gather operand (f32 default -> exact)

    # Hardware-derived VMEM budget (valid on v7x's 64 MiB per-TensorCore VMEM).
    try:
        info = pltpu.get_tpu_info()
        vmem_cap = int(getattr(info, "vmem_capacity_bytes", 0)) or (64 << 20)
    except Exception:  # pragma: no cover - defensive fallback
        vmem_cap = 64 << 20
    vmem_budget = (vmem_cap * 3) // 4      # ~25% headroom

    mm_b = jnp.dtype(mm_dtype).itemsize
    g_b = jnp.dtype(g_dtype).itemsize

    def est_bytes(t):
        resident = 2 * Dp * Kp * mm_b + 2 * Kp * Dp * g_b + 2 * Kp * 4   # dbl-buffered invariants
        per_tile = 2 * t * Dp * 4 + 2 * t * Dp * 4 + 2 * t * 4           # x in, q out, idx out
        inter = t * Kp * (4 + 4 + 4 + g_b) + t * Dp * mm_b               # xc, d, iota/onehot, cast
        return resident + per_tile + inter

    # Row tile: >=128 for lane-dense index stores; shrink for tiny inputs and
    # against the VMEM budget when (tm, K) intermediates get large.
    tm = max(128, min(int(tm), pl.next_power_of_2(max(M, 1))))
    while tm > 128 and 2 * est_bytes(tm) > vmem_budget:
        tm //= 2

    num_tiles = pl.cdiv(M, tm)
    M_pad = num_tiles * tm
    if M_pad != M:
        x2d = jnp.pad(x2d, ((0, M_pad - M), (0, 0)))           # tail rows sliced off below

    vmem_limit = int(min(vmem_budget, max(32 << 20, 2 * est_bytes(tm))))

    cost = pl.CostEstimate(
        flops=int(4 * M_pad * Kp * Dp),                        # distance + gather matmuls
        transcendentals=0,
        bytes_accessed=int(4 * M_pad * Dp + (mm_b + g_b) * Kp * Dp + 4 * Kp
                           + 4 * M_pad * Dp + 4 * M_pad),
    )

    idx2d, q2d = pl.pallas_call(
        _vq_kernel,
        out_shape=(
            jax.ShapeDtypeStruct((num_tiles, tm), jnp.int32),  # lane-dense indices
            jax.ShapeDtypeStruct((M_pad, Dp), jnp.float32),
        ),
        grid_spec=pltpu.PrefetchScalarGridSpec(
            num_scalar_prefetch=0,
            grid=(num_tiles,),
            in_specs=[
                pl.BlockSpec((tm, Dp), lambda i: (i, 0)),      # x row tile
                pl.BlockSpec((Dp, Kp), lambda i: (0, 0)),      # codebook^T (distance), resident
                pl.BlockSpec((Kp, Dp), lambda i: (0, 0)),      # codebook (gather), resident
                pl.BlockSpec((1, Kp), lambda i: (0, 0)),       # 0.5*||c||^2, resident
            ],
            out_specs=[
                pl.BlockSpec((1, tm), lambda i: (i, 0)),       # indices (lane-dense)
                pl.BlockSpec((tm, Dp), lambda i: (i, 0)),      # quantized rows (full-lane stores)
            ],
        ),
        compiler_params=pltpu.CompilerParams(
            dimension_semantics=("parallel",),                 # megacore-shard the M axis
            vmem_limit_bytes=vmem_limit,
        ),
        cost_estimate=cost,
    )(x2d, cbt, cbg, c2h)

    indices = idx2d.reshape(-1)[:M].reshape(tuple(lead))
    quantized = q2d[:M, :D].reshape(tuple(lead) + (D,))
    return indices, quantized


def _reference(x, codebook):
    # Pure-JAX reference of the PyTorch forward (cdist -> argmin -> gather).
    diff = x[..., None, :] - codebook                          # (..., K, D)
    d = jnp.linalg.norm(diff, axis=-1)                         # (..., K)
    idx = jnp.argmin(d, axis=-1)
    return idx, codebook[idx]


if __name__ == "__main__":
    # Module hyper-params (small, synthetic).
    dim = 32
    codebook_size = 128
    batch, seq = 2, 8          # x: (batch, seq, dim) -> cdist over last dim

    key = jax.random.PRNGKey(0)
    kx, kc = jax.random.split(key)
    x = jax.random.normal(kx, (batch, seq, dim), dtype=jnp.float32)
    # nn.Embedding default init: N(0, 1)
    codebook = jax.random.normal(kc, (codebook_size, dim), dtype=jnp.float32)

    # Exact path (f32 distance matmul): bit-exact indices vs. the cdist reference.
    idx_exact, q_exact = vector_quantize(x, codebook, matmul_dtype=None)
    # Default fast path (bf16 distance matmul on the MXU, f32-exact gather).
    idx_fast, q_fast = vector_quantize(x, codebook)
    jax.block_until_ready((idx_exact, q_exact, idx_fast, q_fast))

    ref_idx, ref_q = _reference(x, codebook)

    assert idx_exact.shape == (batch, seq)
    assert q_exact.shape == (batch, seq, dim)
    assert bool(jnp.all(idx_exact == ref_idx))
    assert bool(jnp.allclose(q_exact, ref_q, atol=1e-6))

    # Fast path: near-tied codewords can differ under bf16 ranking, but the
    # gather must be exactly self-consistent with whatever index was chosen.
    assert idx_fast.shape == (batch, seq)
    assert q_fast.shape == (batch, seq, dim)
    assert bool(jnp.allclose(q_fast, codebook[idx_fast], atol=1e-6))

    print("KERNEL_OK")
</pallas_src>

<mosaic_0001>
module attributes {stable_mosaic.version = 11 : i64} {
  func.func @_vq_kernel(%arg0: i32, %arg1: memref<128x128xf32, #tpu.memory_space<vmem>>, %arg2: memref<128x128xf32, #tpu.memory_space<vmem>>, %arg3: memref<128x128xf32, #tpu.memory_space<vmem>>, %arg4: memref<1x128xf32, #tpu.memory_space<vmem>>, %arg5: memref<1x128xi32, #tpu.memory_space<vmem>>, %arg6: memref<128x128xf32, #tpu.memory_space<vmem>>) attributes {dimension_semantics = [#tpu.dimension_semantics<parallel>], iteration_bounds = array<i64: 1>, scalar_prefetch = 0 : i64, scratch_operands = 0 : i64, tpu.core_type = #tpu.core_type<tc>, window_params = [{transform_indices = @transform_0, window_bounds = array<i64: 128, 128>}, {pipeline_mode = #tpu.pipeline_mode<synchronous>, transform_indices = @transform_1, window_bounds = array<i64: 128, 128>}, {pipeline_mode = #tpu.pipeline_mode<synchronous>, transform_indices = @transform_2, window_bounds = array<i64: 128, 128>}, {pipeline_mode = #tpu.pipeline_mode<synchronous>, transform_indices = @transform_3, window_bounds = array<i64: 1, 128>}, {transform_indices = @transform_4, window_bounds = array<i64: 1, 128>}, {transform_indices = @transform_5, window_bounds = array<i64: 128, 128>}]} {
    %c0 = arith.constant 0 : index
    %c0_0 = arith.constant 0 : index
    %0 = vector.load %arg1[%c0, %c0_0] : memref<128x128xf32, #tpu.memory_space<vmem>>, vector<128x128xf32>
    %c0_1 = arith.constant 0 : index
    %c0_2 = arith.constant 0 : index
    %1 = vector.load %arg2[%c0_1, %c0_2] : memref<128x128xf32, #tpu.memory_space<vmem>>, vector<128x128xf32>
    %cst = arith.constant dense<0.000000e+00> : vector<128x128xf32>
    %2 = tpu.matmul %0, %1, %cst {dimension_numbers = #tpu.dot_dimension_numbers<[1], [0], [0], [1], [0, 0, 1, 1], [], []>} : vector<128x128xf32>, vector<128x128xf32>, vector<128x128xf32> -> vector<128x128xf32>
    %c0_3 = arith.constant 0 : index
    %c0_4 = arith.constant 0 : index
    %3 = vector.load %arg4[%c0_3, %c0_4] : memref<1x128xf32, #tpu.memory_space<vmem>>, vector<1x128xf32>
    %4 = vector.broadcast %3 : vector<1x128xf32> to vector<128x128xf32>
    %5 = arith.subf %4, %2 : vector<128x128xf32>
    %6 = tpu.reduce_index %5 {axis = 1 : i32, kind = #tpu.reduction_kind<arg_min>} : vector<128x128xf32> -> vector<128xi32>
    %7 = vector.shape_cast %6 : vector<128xi32> to vector<1x128xi32>
    %c0_5 = arith.constant 0 : index
    %c0_6 = arith.constant 0 : index
    %8 = vector.load %arg5[%c0_5, %c0_6] : memref<1x128xi32, #tpu.memory_space<vmem>>, vector<1x128xi32>
    tpu.vector_store %arg5[%c0_5, %c0_6], %7 {strides = array<i32>} : memref<1x128xi32, #tpu.memory_space<vmem>>, vector<1x128xi32>,
    %c0_7 = arith.constant 0 : index
    %c0_8 = arith.constant 0 : index
    %9 = vector.load %arg3[%c0_7, %c0_8] : memref<128x128xf32, #tpu.memory_space<vmem>>, vector<128x128xf32>
    %10 = tpu.iota {dimensions = array<i32: 1>} : vector<128x128xi32>
    %11 = vector.shape_cast %6 : vector<128xi32> to vector<128x1xi32>
    %12 = vector.broadcast %11 : vector<128x1xi32> to vector<128x128xi32>
    %13 = arith.cmpi eq, %10, %12 : vector<128x128xi32>
    %14 = arith.extui %13 : vector<128x128xi1> to vector<128x128xi32>
    %15 = arith.sitofp %14 : vector<128x128xi32> to vector<128x128xf32>
    %cst_9 = arith.constant dense<0.000000e+00> : vector<128x128xf32>
    %16 = tpu.matmul %15, %9, %cst_9 {dimension_numbers = #tpu.dot_dimension_numbers<[1], [0], [0], [1], [0, 0, 1, 1], [], []>} : vector<128x128xf32>, vector<128x128xf32>, vector<128x128xf32> -> vector<128x128xf32>
    %c0_10 = arith.constant 0 : index
    %c0_11 = arith.constant 0 : index
    %17 = vector.load %arg6[%c0_10, %c0_11] : memref<128x128xf32, #tpu.memory_space<vmem>>, vector<128x128xf32>
    tpu.vector_store %arg6[%c0_10, %c0_11], %16 {strides = array<i32>} : memref<128x128xf32, #tpu.memory_space<vmem>>, vector<128x128xf32>,
    return
  }
  func.func @transform_0(%arg0: i32) -> (i32, i32) {
    %c0_i32 = arith.constant 0 : i32
    %c0_i32_0 = arith.constant 0 : i32
    return %arg0, %c0_i32 : i32, i32
  }
  func.func @transform_1(%arg0: i32) -> (i32, i32) {
    %c0_i32 = arith.constant 0 : i32
    %c0_i32_0 = arith.constant 0 : i32
    %c0_i32_1 = arith.constant 0 : i32
    return %c0_i32, %c0_i32_0 : i32, i32
  }
  func.func @transform_2(%arg0: i32) -> (i32, i32) {
    %c0_i32 = arith.constant 0 : i32
    %c0_i32_0 = arith.constant 0 : i32
    %c0_i32_1 = arith.constant 0 : i32
    return %c0_i32, %c0_i32_0 : i32, i32
  }
  func.func @transform_3(%arg0: i32) -> (i32, i32) {
    %c0_i32 = arith.constant 0 : i32
    %c0_i32_0 = arith.constant 0 : i32
    %c0_i32_1 = arith.constant 0 : i32
    return %c0_i32, %c0_i32_0 : i32, i32
  }
  func.func @transform_4(%arg0: i32) -> (i32, i32) {
    %c0_i32 = arith.constant 0 : i32
    %c0_i32_0 = arith.constant 0 : i32
    return %arg0, %c0_i32 : i32, i32
  }
  func.func @transform_5(%arg0: i32) -> (i32, i32) {
    %c0_i32 = arith.constant 0 : i32
    %c0_i32_0 = arith.constant 0 : i32
    return %arg0, %c0_i32 : i32, i32
  }
}

</mosaic_0001>

<llo_original>
// kernel: tpu_custom_call.1
$region0: #{tpu_custom_call.1}
  #allocation0 [shape = 'u32[]', space=smem, size = 0x4, offset = 0x4, fixed_abs, tag = 'smem constant byte address 0x4 - core index']
  #allocation1 [shape = 'u32[144,128]{1,0:T(1,128)}', space=vmem, size = 0x12000, scoped, tag = 'internal scratch']
  %s0 = inlined_call_operand.hbm [shape: f32[128,128], index: 0, kind: input, shape index: {}]
  %s1 = inlined_call_operand.hbm [shape: f32[128,128], index: 1, kind: input, shape index: {}]
  %s2 = inlined_call_operand.hbm [shape: f32[128,128], index: 2, kind: input, shape index: {}]
  %s3 = inlined_call_operand.vmem [shape: f32[1,128], index: 3, kind: input, shape index: {}]
  %s4 = inlined_call_operand.hbm [shape: s32[1,128], index: 4, kind: output, shape index: {0}]
  %s5 = inlined_call_operand.hbm [shape: f32[128,128], index: 5, kind: output, shape index: {1}]
  %6 = xla_tuple %s4, %s5
  %s7 = sld [smem:[#allocation0]]
  $region46: #{tpu_custom_call.1} parent=0
    _
  %s9 = ssub.s32 1, %s7
  %s10 = scalar_select 0, %s9, %s7
  $region1: #{tpu_custom_call.1} parent=0
    #allocation2 [shape = 'u8[65536]{0}', space=vmem, size = 0x10000, scoped, tag = 'input window, operand 0, single buffered']
    #allocation3 [shape = 's32[1]{0}', space=sflag, size = 0x4, scoped, tag = 'scoped memory for tpu_custom_call.1']
    #allocation4 [shape = 's32[1]{0}', space=sflag, size = 0x4, scoped, tag = 'scoped memory for tpu_custom_call.1']
    #allocation5 [shape = 'u8[65536]{0}', space=vmem, size = 0x10000, scoped, tag = 'input window, operand 1, single buffered']
    #allocation6 [shape = 's32[1]{0}', space=sflag, size = 0x4, scoped, tag = 'scoped memory for tpu_custom_call.1']
    #allocation7 [shape = 'u8[65536]{0}', space=vmem, size = 0x10000, scoped, tag = 'input window, operand 2, single buffered']
    #allocation8 [shape = 'u8[512]{0}', space=vmem, size = 0x400, scoped, tag = 'output window, operand 0, single buffered']
    #allocation9 [shape = 'u8[65536]{0}', space=vmem, size = 0x10000, scoped, tag = 'output window, operand 1, single buffered']
    #allocation10 [shape = 's32[1]{0}', space=sflag, size = 0x4, scoped, tag = 'scoped memory for tpu_custom_call.1']
    %11 = vsyncpa [#allocation3], 0
    %12 = vsyncpa [#allocation6], 0
    %13 = vsyncpa [#allocation4], 0
    %14 = vsyncpa [#allocation10], 0
    // Predicated region
    $region2: #{tpu_custom_call.1} parent=1 // pred_check
      _
    $region3: #{tpu_custom_call.1} parent=1 // pred_check_branch
      %16 = sbr.rel (0) target = $region5
    $region4: #{tpu_custom_call.1} parent=1 // pred_region
      %s18 = ssub.s32 2048, 2048
      %19 = vsyncadd [#allocation3], %s18
      %s20 = sshll.u32 [#allocation2], 4
      %s21 = int_to_ptr.vmem [resolvable:$true] %s20
      %26 = dma.hbm_to_vmem [thread:$0]  %s0, 2048, %s21, [#allocation3], 128, 128, 8
    $region5: #{tpu_custom_call.1} parent=1 // pred_fallthru
      _
    // Predicated region
    $region6: #{tpu_custom_call.1} parent=1 // pred_check
      _
    $region7: #{tpu_custom_call.1} parent=1 // pred_check_branch
      %28 = sbr.rel (0) target = $region9
    $region8: #{tpu_custom_call.1} parent=1 // pred_region
      %s30 = ssub.s32 2048, 2048
      %31 = vsyncadd [#allocation6], %s30
      %s32 = sshll.u32 [#allocation5], 4
      %s33 = int_to_ptr.vmem [resolvable:$true] %s32
      %38 = dma.hbm_to_vmem [thread:$0]  %s1, 2048, %s33, [#allocation6], 128, 128, 8
    $region9: #{tpu_custom_call.1} parent=1 // pred_fallthru
      _
    // Predicated region
    $region10: #{tpu_custom_call.1} parent=1 // pred_check
      _
    $region11: #{tpu_custom_call.1} parent=1 // pred_check_branch
      %40 = sbr.rel (0) target = $region13
    $region12: #{tpu_custom_call.1} parent=1 // pred_region
      %s42 = ssub.s32 2048, 2048
      %43 = vsyncadd [#allocation6], %s42
      %s44 = sshll.u32 [#allocation7], 4
      %s45 = int_to_ptr.vmem [resolvable:$true] %s44
      %50 = dma.hbm_to_vmem [thread:$0]  %s2, 2048, %s45, [#allocation6], 128, 128, 8
    $region13: #{tpu_custom_call.1} parent=1 // pred_fallthru
      _
    // Predicated region
    $region14: #{tpu_custom_call.1} parent=1 // pred_check
      _
    $region15: #{tpu_custom_call.1} parent=1 // pred_check_branch
      %52 = sbr.rel (0) target = $region17
    $region16: #{tpu_custom_call.1} parent=1 // pred_region
      _
    $region17: #{tpu_custom_call.1} parent=1 // pred_fallthru
      _
    // Predicated region
    $region18: #{tpu_custom_call.1} parent=1 // pred_check
      _
    $region19: #{tpu_custom_call.1} parent=1 // pred_check_branch
      %54 = sbr.rel (0) target = $region21
    $region20: #{tpu_custom_call.1} parent=1 // pred_region
      %55 = dma.done [#allocation3], 2048
    $region21: #{tpu_custom_call.1} parent=1 // pred_fallthru
      _
    // Predicated region
    $region22: #{tpu_custom_call.1} parent=1 // pred_check
      _
    $region23: #{tpu_custom_call.1} parent=1 // pred_check_branch
      %57 = sbr.rel (0) target = $region25
    $region24: #{tpu_custom_call.1} parent=1 // pred_region
      %58 = dma.done [#allocation6], 2048
    $region25: #{tpu_custom_call.1} parent=1 // pred_fallthru
      _
    // Predicated region
    $region26: #{tpu_custom_call.1} parent=1 // pred_check
      _
    $region27: #{tpu_custom_call.1} parent=1 // pred_check_branch
      %60 = sbr.rel (0) target = $region29
    $region28: #{tpu_custom_call.1} parent=1 // pred_region
      %61 = dma.done [#allocation6], 2048
    $region29: #{tpu_custom_call.1} parent=1 // pred_fallthru
      _
    %v62 = vld [vmem:[#allocation2] sm:$0xff]
    %v63 = vld [vmem:[#allocation2 + $0x8] sm:$0xff]
    %v64 = vld [vmem:[#allocation2 + $0x10] sm:$0xff]
    %v65 = vld [vmem:[#allocation2 + $0x18] sm:$0xff]
    %v66 = vld [vmem:[#allocation2 + $0x20] sm:$0xff]
    %v67 = vld [vmem:[#allocation2 + $0x28] sm:$0xff]
    %v68 = vld [vmem:[#allocation2 + $0x30] sm:$0xff]
    %v69 = vld [vmem:[#allocation2 + $0x38] sm:$0xff]
    %v70 = vld [vmem:[#allocation2 + $0x40] sm:$0xff]
    %v71 = vld [vmem:[#allocation2 + $0x48] sm:$0xff]
    %v72 = vld [vmem:[#allocation2 + $0x50] sm:$0xff]
    %v73 = vld [vmem:[#allocation2 + $0x58] sm:$0xff]
    %v74 = vld [vmem:[#allocation2 + $0x60] sm:$0xff]
    %v75 = vld [vmem:[#allocation2 + $0x68] sm:$0xff]
    %v76 = vld [vmem:[#allocation2 + $0x70] sm:$0xff]
    %v77 = vld [vmem:[#allocation2 + $0x78] sm:$0xff]
    %v78 = vld [vmem:[#allocation5] sm:$0xff]
    %v79 = vld [vmem:[#allocation5 + $0x8] sm:$0xff]
    %v80 = vld [vmem:[#allocation5 + $0x10] sm:$0xff]
    %v81 = vld [vmem:[#allocation5 + $0x18] sm:$0xff]
    %v82 = vld [vmem:[#allocation5 + $0x20] sm:$0xff]
    %v83 = vld [vmem:[#allocation5 + $0x28] sm:$0xff]
    %v84 = vld [vmem:[#allocation5 + $0x30] sm:$0xff]
    %v85 = vld [vmem:[#allocation5 + $0x38] sm:$0xff]
    %v86 = vld [vmem:[#allocation5 + $0x40] sm:$0xff]
    %v87 = vld [vmem:[#allocation5 + $0x48] sm:$0xff]
    %v88 = vld [vmem:[#allocation5 + $0x50] sm:$0xff]
    %v89 = vld [vmem:[#allocation5 + $0x58] sm:$0xff]
    %v90 = vld [vmem:[#allocation5 + $0x60] sm:$0xff]
    %v91 = vld [vmem:[#allocation5 + $0x68] sm:$0xff]
    %v92 = vld [vmem:[#allocation5 + $0x70] sm:$0xff]
    %v93 = vld [vmem:[#allocation5 + $0x78] sm:$0xff]
    %94 = vmatprep.subr.mxu0 0.0
    %95 = vmatpush1.msra.mxu0 %v93
    %96 = vmatprep.subr.mxu0 0.0
    %97 = vmatpush1.msra.mxu0 %v92
    %98 = vmatprep.subr.mxu0 0.0
    %99 = vmatpush1.msra.mxu0 %v91
    %100 = vmatprep.subr.mxu0 0.0
    %101 = vmatpush1.msra.mxu0 %v90
    %102 = vmatprep.subr.mxu0 0.0
    %103 = vmatpush1.msra.mxu0 %v89
    %104 = vmatprep.subr.mxu0 0.0
    %105 = vmatpush1.msra.mxu0 %v88
    %106 = vmatprep.subr.mxu0 0.0
    %107 = vmatpush1.msra.mxu0 %v87
    %108 = vmatprep.subr.mxu0 0.0
    %109 = vmatpush1.msra.mxu0 %v86
    %110 = vmatprep.subr.mxu0 0.0
    %111 = vmatpush1.msra.mxu0 %v85
    %112 = vmatprep.subr.mxu0 0.0
    %113 = vmatpush1.msra.mxu0 %v84
    %114 = vmatprep.subr.mxu0 0.0
    %115 = vmatpush1.msra.mxu0 %v83
    %116 = vmatprep.subr.mxu0 0.0
    %117 = vmatpush1.msra.mxu0 %v82
    %118 = vmatprep.subr.mxu0 0.0
    %119 = vmatpush1.msra.mxu0 %v81
    %120 = vmatprep.subr.mxu0 0.0
    %121 = vmatpush1.msra.mxu0 %v80
    %122 = vmatprep.subr.mxu0 0.0
    %123 = vmatpush1.msra.mxu0 %v79
    %124 = vmatprep.subr.mxu0 0.0
    %125 = vmatpush1.msra.mxu0 %v78
    %126 = vmatprep.subr.mxu0 0.0
    %127 = vmatpush2.msra.mxu0 0.0
    %128 = vmatprep.subr.mxu0 0.0
    %129 = vmatpush2.msra.mxu0 0.0
    %130 = vmatprep.subr.mxu0 0.0
    %131 = vmatpush2.msra.mxu0 0.0
    %132 = vmatprep.subr.mxu0 0.0
    %133 = vmatpush2.msra.mxu0 0.0
    %134 = vmatprep.subr.mxu0 0.0
    %135 = vmatpush2.msra.mxu0 0.0
    %136 = vmatprep.subr.mxu0 0.0
    %137 = vmatpush2.msra.mxu0 0.0
    %138 = vmatprep.subr.mxu0 0.0
    %139 = vmatpush2.msra.mxu0 0.0
    %140 = vmatprep.subr.mxu0 0.0
    %141 = vmatpush2.msra.mxu0 0.0
    %142 = vmatprep.subr.mxu0 0.0
    %143 = vmatpush2.msra.mxu0 0.0
    %144 = vmatprep.subr.mxu0 0.0
    %145 = vmatpush2.msra.mxu0 0.0
    %146 = vmatprep.subr.mxu0 0.0
    %147 = vmatpush2.msra.mxu0 0.0
    %148 = vmatprep.subr.mxu0 0.0
    %149 = vmatpush2.msra.mxu0 0.0
    %150 = vmatprep.subr.mxu0 0.0
    %151 = vmatpush2.msra.mxu0 0.0
    %152 = vmatprep.subr.mxu0 0.0
    %153 = vmatpush2.msra.mxu0 0.0
    %154 = vmatprep.subr.mxu0 0.0
    %155 = vmatpush2.msra.mxu0 0.0
    %156 = vmatprep.subr.mxu0 0.0
    %157 = vmatpush2.msra.mxu0 0.0
    %158 = vmatprep.mubr.f32.mxu0 0.0
    %159 = vmatmul.mubr.f32.gmra.mxu0 %v62
    %v160 = vpop.f32.mrf.mxu0
    %v161 = vadd.f32 0.0, %v160
    %v162 = vpop.f32.mrf.mxu0
    %163 = vmatprep.mubr.f32.mxu0 0.0
    %164 = vmatmul.mubr.f32.gmra.mxu0 %v63
    %v165 = vpop.f32.mrf.mxu0
    %v166 = vadd.f32 0.0, %v165
    %v167 = vpop.f32.mrf.mxu0
    %168 = vmatprep.mubr.f32.mxu0 0.0
    %169 = vmatmul.mubr.f32.gmra.mxu0 %v64
    %v170 = vpop.f32.mrf.mxu0
    %v171 = vadd.f32 0.0, %v170
    %v172 = vpop.f32.mrf.mxu0
    %173 = vmatprep.mubr.f32.mxu0 0.0
    %174 = vmatmul.mubr.f32.gmra.mxu0 %v65
    %v175 = vpop.f32.mrf.mxu0
    %v176 = vadd.f32 0.0, %v175
    %v177 = vpop.f32.mrf.mxu0
    %178 = vmatprep.mubr.f32.mxu0 0.0
    %179 = vmatmul.mubr.f32.gmra.mxu0 %v66
    %v180 = vpop.f32.mrf.mxu0
    %v181 = vadd.f32 0.0, %v180
    %v182 = vpop.f32.mrf.mxu0
    %183 = vmatprep.mubr.f32.mxu0 0.0
    %184 = vmatmul.mubr.f32.gmra.mxu0 %v67
    %v185 = vpop.f32.mrf.mxu0
    %v186 = vadd.f32 0.0, %v185
    %v187 = vpop.f32.mrf.mxu0
    %188 = vmatprep.mubr.f32.mxu0 0.0
    %189 = vmatmul.mubr.f32.gmra.mxu0 %v68
    %v190 = vpop.f32.mrf.mxu0
    %v191 = vadd.f32 0.0, %v190
    %v192 = vpop.f32.mrf.mxu0
    %193 = vmatprep.mubr.f32.mxu0 0.0
    %194 = vmatmul.mubr.f32.gmra.mxu0 %v69
    %v195 = vpop.f32.mrf.mxu0
    %v196 = vadd.f32 0.0, %v195
    %v197 = vpop.f32.mrf.mxu0
    %198 = vmatprep.mubr.f32.mxu0 0.0
    %199 = vmatmul.mubr.f32.gmra.mxu0 %v70
    %v200 = vpop.f32.mrf.mxu0
    %v201 = vadd.f32 0.0, %v200
    %v202 = vpop.f32.mrf.mxu0
    %203 = vmatprep.mubr.f32.mxu0 0.0
    %204 = vmatmul.mubr.f32.gmra.mxu0 %v71
    %v205 = vpop.f32.mrf.mxu0
    %v206 = vadd.f32 0.0, %v205
    %v207 = vpop.f32.mrf.mxu0
    %208 = vmatprep.mubr.f32.mxu0 0.0
    %209 = vmatmul.mubr.f32.gmra.mxu0 %v72
    %v210 = vpop.f32.mrf.mxu0
    %v211 = vadd.f32 0.0, %v210
    %v212 = vpop.f32.mrf.mxu0
    %213 = vmatprep.mubr.f32.mxu0 0.0
    %214 = vmatmul.mubr.f32.gmra.mxu0 %v73
    %v215 = vpop.f32.mrf.mxu0
    %v216 = vadd.f32 0.0, %v215
    %v217 = vpop.f32.mrf.mxu0
    %218 = vmatprep.mubr.f32.mxu0 0.0
    %219 = vmatmul.mubr.f32.gmra.mxu0 %v74
    %v220 = vpop.f32.mrf.mxu0
    %v221 = vadd.f32 0.0, %v220
    %v222 = vpop.f32.mrf.mxu0
    %223 = vmatprep.mubr.f32.mxu0 0.0
    %224 = vmatmul.mubr.f32.gmra.mxu0 %v75
    %v225 = vpop.f32.mrf.mxu0
    %v226 = vadd.f32 0.0, %v225
    %v227 = vpop.f32.mrf.mxu0
    %228 = vmatprep.mubr.f32.mxu0 0.0
    %229 = vmatmul.mubr.f32.gmra.mxu0 %v76
    %v230 = vpop.f32.mrf.mxu0
    %v231 = vadd.f32 0.0, %v230
    %v232 = vpop.f32.mrf.mxu0
    %233 = vmatprep.mubr.f32.mxu0 0.0
    %234 = vmatmul.mubr.f32.gmra.mxu0 %v77
    %v235 = vpop.f32.mrf.mxu0
    %v236 = vadd.f32 0.0, %v235
    %v237 = vpop.f32.mrf.mxu0
    %238 = vdwg.mxu0
    %v239 = vld [vmem:[%s3] sm:$0x1]
    %v241 = vlaneseq
    %v242 = vshrl.u32 %v241, 7
    %v243 = vsub.s32 0, %v242
    %v244 = vrot.slane %v239, %v243
    %v246 = vsub.f32 %v244, %v161
    %v247 = vsub.f32 %v244, %v166
    %v248 = vsub.f32 %v244, %v171
    %v249 = vsub.f32 %v244, %v176
    %v250 = vsub.f32 %v244, %v181
    %v251 = vsub.f32 %v244, %v186
    %v252 = vsub.f32 %v244, %v191
    %v253 = vsub.f32 %v244, %v196
    %v254 = vsub.f32 %v244, %v201
    %v255 = vsub.f32 %v244, %v206
    %v256 = vsub.f32 %v244, %v211
    %v257 = vsub.f32 %v244, %v216
    %v258 = vsub.f32 %v244, %v221
    %v259 = vsub.f32 %v244, %v226
    %v260 = vsub.f32 %v244, %v231
    %v261 = vsub.f32 %v244, %v236
    %262 = vmin.index.xlane.f32.xlu0 %v246
    %v263 = vpop.xlane.xlu0 %262
    %264 = vmin.index.xlane.f32.xlu0 %v247
    %v265 = vpop.xlane.xlu0 %264
    %266 = vmin.index.xlane.f32.xlu0 %v248
    %v267 = vpop.xlane.xlu0 %266
    %268 = vmin.index.xlane.f32.xlu0 %v249
    %v269 = vpop.xlane.xlu0 %268
    %270 = vmin.index.xlane.f32.xlu0 %v250
    %v271 = vpop.xlane.xlu0 %270
    %272 = vmin.index.xlane.f32.xlu0 %v251
    %v273 = vpop.xlane.xlu0 %272
    %274 = vmin.index.xlane.f32.xlu0 %v252
    %v275 = vpop.xlane.xlu0 %274
    %276 = vmin.index.xlane.f32.xlu0 %v253
    %v277 = vpop.xlane.xlu0 %276
    %278 = vmin.index.xlane.f32.xlu0 %v254
    %v279 = vpop.xlane.xlu0 %278
    %280 = vmin.index.xlane.f32.xlu0 %v255
    %v281 = vpop.xlane.xlu0 %280
    %282 = vmin.index.xlane.f32.xlu0 %v256
    %v283 = vpop.xlane.xlu0 %282
    %284 = vmin.index.xlane.f32.xlu0 %v257
    %v285 = vpop.xlane.xlu0 %284
    %286 = vmin.index.xlane.f32.xlu0 %v258
    %v287 = vpop.xlane.xlu0 %286
    %288 = vmin.index.xlane.f32.xlu0 %v259
    %v289 = vpop.xlane.xlu0 %288
    %290 = vmin.index.xlane.f32.xlu0 %v260
    %v291 = vpop.xlane.xlu0 %290
    %292 = vmin.index.xlane.f32.xlu0 %v261
    %v293 = vpop.xlane.xlu0 %292
    %v294 = vlaneseq
    %v295 = vand.u32 %v294, 127
    %v296 = vlaneseq
    %v297 = vshrl.u32 %v296, 7
    %v298 = vsub.s32 %v295, %v297
    %v299 = vrot.slane %v263, %v298
    %v300 = vadd.s32 %v295, 4294967288
    %v301 = vlaneseq
    %v302 = vshrl.u32 %v301, 7
    %v303 = vsub.s32 %v300, %v302
    %v304 = vrot.slane %v265, %v303
    %vm305 = vcmask 130112
    %v306 = vsel %vm305, %v304, %v299
    %v307 = vadd.s32 %v295, 4294967280
    %v308 = vlaneseq
    %v309 = vshrl.u32 %v308, 7
    %v310 = vsub.s32 %v307, %v309
    %v311 = vrot.slane %v267, %v310
    %vm312 = vcmask 195712
    %v313 = vsel %vm312, %v311, %v306
    %v314 = vadd.s32 %v295, 4294967272
    %v315 = vlaneseq
    %v316 = vshrl.u32 %v315, 7
    %v317 = vsub.s32 %v314, %v316
    %v318 = vrot.slane %v269, %v317
    %vm319 = vcmask 261312
    %v320 = vsel %vm319, %v318, %v313
    %v321 = vadd.s32 %v295, 4294967264
    %v322 = vlaneseq
    %v323 = vshrl.u32 %v322, 7
    %v324 = vsub.s32 %v321, %v323
    %v325 = vrot.slane %v271, %v324
    %vm326 = vcmask 326912
    %v327 = vsel %vm326, %v325, %v320
    %v328 = vadd.s32 %v295, 4294967256
    %v329 = vlaneseq
    %v330 = vshrl.u32 %v329, 7
    %v331 = vsub.s32 %v328, %v330
    %v332 = vrot.slane %v273, %v331
    %vm333 = vcmask 392512
    %v334 = vsel %vm333, %v332, %v327
    %v335 = vadd.s32 %v295, 4294967248
    %v336 = vlaneseq
    %v337 = vshrl.u32 %v336, 7
    %v338 = vsub.s32 %v335, %v337
    %v339 = vrot.slane %v275, %v338
    %vm340 = vcmask 458112
    %v341 = vsel %vm340, %v339, %v334
    %v342 = vadd.s32 %v295, 4294967240
    %v343 = vlaneseq
    %v344 = vshrl.u32 %v343, 7
    %v345 = vsub.s32 %v342, %v344
    %v346 = vrot.slane %v277, %v345
    %vm347 = vcmask 523712
    %v348 = vsel %vm347, %v346, %v341
    %v349 = vadd.s32 %v295, 4294967232
    %v350 = vlaneseq
    %v351 = vshrl.u32 %v350, 7
    %v352 = vsub.s32 %v349, %v351
    %v353 = vrot.slane %v279, %v352
    %vm354 = vcmask 589312
    %v355 = vsel %vm354, %v353, %v348
    %v356 = vadd.s32 %v295, 4294967224
    %v357 = vlaneseq
    %v358 = vshrl.u32 %v357, 7
    %v359 = vsub.s32 %v356, %v358
    %v360 = vrot.slane %v281, %v359
    %vm361 = vcmask 654912
    %v362 = vsel %vm361, %v360, %v355
    %v363 = vadd.s32 %v295, 4294967216
    %v364 = vlaneseq
    %v365 = vshrl.u32 %v364, 7
    %v366 = vsub.s32 %v363, %v365
    %v367 = vrot.slane %v283, %v366
    %vm368 = vcmask 720512
    %v369 = vsel %vm368, %v367, %v362
    %v370 = vadd.s32 %v295, 4294967208
    %v371 = vlaneseq
    %v372 = vshrl.u32 %v371, 7
    %v373 = vsub.s32 %v370, %v372
    %v374 = vrot.slane %v285, %v373
    %vm375 = vcmask 786112
    %v376 = vsel %vm375, %v374, %v369
    %v377 = vadd.s32 %v295, 4294967200
    %v378 = vlaneseq
    %v379 = vshrl.u32 %v378, 7
    %v380 = vsub.s32 %v377, %v379
    %v381 = vrot.slane %v287, %v380
    %vm382 = vcmask 851712
    %v383 = vsel %vm382, %v381, %v376
    %v384 = vadd.s32 %v295, 4294967192
    %v385 = vlaneseq
    %v386 = vshrl.u32 %v385, 7
    %v387 = vsub.s32 %v384, %v386
    %v388 = vrot.slane %v289, %v387
    %vm389 = vcmask 917312
    %v390 = vsel %vm389, %v388, %v383
    %v391 = vadd.s32 %v295, 4294967184
    %v392 = vlaneseq
    %v393 = vshrl.u32 %v392, 7
    %v394 = vsub.s32 %v391, %v393
    %v395 = vrot.slane %v291, %v394
    %vm396 = vcmask 982912
    %v397 = vsel %vm396, %v395, %v390
    %v398 = vadd.s32 %v295, 4294967176
    %v399 = vlaneseq
    %v400 = vshrl.u32 %v399, 7
    %v401 = vsub.s32 %v398, %v400
    %v402 = vrot.slane %v293, %v401
    %vm403 = vcmask 1048512
    %v404 = vsel %vm403, %v402, %v397
    %405 = vst [vmem:[#allocation8] sm:$0x1] %v404
    %v406 = vld [vmem:[#allocation7] sm:$0xff]
    %v407 = vld [vmem:[#allocation7 + $0x8] sm:$0xff]
    %v408 = vld [vmem:[#allocation7 + $0x10] sm:$0xff]
    %v409 = vld [vmem:[#allocation7 + $0x18] sm:$0xff]
    %v410 = vld [vmem:[#allocation7 + $0x20] sm:$0xff]
    %v411 = vld [vmem:[#allocation7 + $0x28] sm:$0xff]
    %v412 = vld [vmem:[#allocation7 + $0x30] sm:$0xff]
    %v413 = vld [vmem:[#allocation7 + $0x38] sm:$0xff]
    %v414 = vld [vmem:[#allocation7 + $0x40] sm:$0xff]
    %v415 = vld [vmem:[#allocation7 + $0x48] sm:$0xff]
    %v416 = vld [vmem:[#allocation7 + $0x50] sm:$0xff]
    %v417 = vld [vmem:[#allocation7 + $0x58] sm:$0xff]
    %v418 = vld [vmem:[#allocation7 + $0x60] sm:$0xff]
    %v419 = vld [vmem:[#allocation7 + $0x68] sm:$0xff]
    %v420 = vld [vmem:[#allocation7 + $0x70] sm:$0xff]
    %v421 = vld [vmem:[#allocation7 + $0x78] sm:$0xff]
    %vm422 = vcmp.eq.s32.totalorder %v295, %v263
    %vm423 = vcmp.eq.s32.totalorder %v295, %v265
    %vm424 = vcmp.eq.s32.totalorder %v295, %v267
    %vm425 = vcmp.eq.s32.totalorder %v295, %v269
    %vm426 = vcmp.eq.s32.totalorder %v295, %v271
    %vm427 = vcmp.eq.s32.totalorder %v295, %v273
    %vm428 = vcmp.eq.s32.totalorder %v295, %v275
    %vm429 = vcmp.eq.s32.totalorder %v295, %v277
    %vm430 = vcmp.eq.s32.totalorder %v295, %v279
    %vm431 = vcmp.eq.s32.totalorder %v295, %v281
    %vm432 = vcmp.eq.s32.totalorder %v295, %v283
    %vm433 = vcmp.eq.s32.totalorder %v295, %v285
    %vm434 = vcmp.eq.s32.totalorder %v295, %v287
    %vm435 = vcmp.eq.s32.totalorder %v295, %v289
    %vm436 = vcmp.eq.s32.totalorder %v295, %v291
    %vm437 = vcmp.eq.s32.totalorder %v295, %v293
    %v438 = vsel %vm422, 1, 0
    %v439 = vsel %vm423, 1, 0
    %v440 = vsel %vm424, 1, 0
    %v441 = vsel %vm425, 1, 0
    %v442 = vsel %vm426, 1, 0
    %v443 = vsel %vm427, 1, 0
    %v444 = vsel %vm428, 1, 0
    %v445 = vsel %vm429, 1, 0
    %v446 = vsel %vm430, 1, 0
    %v447 = vsel %vm431, 1, 0
    %v448 = vsel %vm432, 1, 0
    %v449 = vsel %vm433, 1, 0
    %v450 = vsel %vm434, 1, 0
    %v451 = vsel %vm435, 1, 0
    %v452 = vsel %vm436, 1, 0
    %v453 = vsel %vm437, 1, 0
    %v454 = vcvt.s32.f32 %v438
    %v455 = vcvt.s32.f32 %v439
    %v456 = vcvt.s32.f32 %v440
    %v457 = vcvt.s32.f32 %v441
    %v458 = vcvt.s32.f32 %v442
    %v459 = vcvt.s32.f32 %v443
    %v460 = vcvt.s32.f32 %v444
    %v461 = vcvt.s32.f32 %v445
    %v462 = vcvt.s32.f32 %v446
    %v463 = vcvt.s32.f32 %v447
    %v464 = vcvt.s32.f32 %v448
    %v465 = vcvt.s32.f32 %v449
    %v466 = vcvt.s32.f32 %v450
    %v467 = vcvt.s32.f32 %v451
    %v468 = vcvt.s32.f32 %v452
    %v469 = vcvt.s32.f32 %v453
    %470 = vmatprep.subr.mxu0 0.0
    %471 = vmatpush1.msra.mxu0 %v421
    %472 = vmatprep.subr.mxu0 0.0
    %473 = vmatpush1.msra.mxu0 %v420
    %474 = vmatprep.subr.mxu0 0.0
    %475 = vmatpush1.msra.mxu0 %v419
    %476 = vmatprep.subr.mxu0 0.0
    %477 = vmatpush1.msra.mxu0 %v418
    %478 = vmatprep.subr.mxu0 0.0
    %479 = vmatpush1.msra.mxu0 %v417
    %480 = vmatprep.subr.mxu0 0.0
    %481 = vmatpush1.msra.mxu0 %v416
    %482 = vmatprep.subr.mxu0 0.0
    %483 = vmatpush1.msra.mxu0 %v415
    %484 = vmatprep.subr.mxu0 0.0
    %485 = vmatpush1.msra.mxu0 %v414
    %486 = vmatprep.subr.mxu0 0.0
    %487 = vmatpush1.msra.mxu0 %v413
    %488 = vmatprep.subr.mxu0 0.0
    %489 = vmatpush1.msra.mxu0 %v412
    %490 = vmatprep.subr.mxu0 0.0
    %491 = vmatpush1.msra.mxu0 %v411
    %492 = vmatprep.subr.mxu0 0.0
    %493 = vmatpush1.msra.mxu0 %v410
    %494 = vmatprep.subr.mxu0 0.0
    %495 = vmatpush1.msra.mxu0 %v409
    %496 = vmatprep.subr.mxu0 0.0
    %497 = vmatpush1.msra.mxu0 %v408
    %498 = vmatprep.subr.mxu0 0.0
    %499 = vmatpush1.msra.mxu0 %v407
    %500 = vmatprep.subr.mxu0 0.0
    %501 = vmatpush1.msra.mxu0 %v406
    %502 = vmatprep.subr.mxu0 0.0
    %503 = vmatpush2.msra.mxu0 0.0
    %504 = vmatprep.subr.mxu0 0.0
    %505 = vmatpush2.msra.mxu0 0.0
    %506 = vmatprep.subr.mxu0 0.0
    %507 = vmatpush2.msra.mxu0 0.0
    %508 = vmatprep.subr.mxu0 0.0
    %509 = vmatpush2.msra.mxu0 0.0
    %510 = vmatprep.subr.mxu0 0.0
    %511 = vmatpush2.msra.mxu0 0.0
    %512 = vmatprep.subr.mxu0 0.0
    %513 = vmatpush2.msra.mxu0 0.0
    %514 = vmatprep.subr.mxu0 0.0
    %515 = vmatpush2.msra.mxu0 0.0
    %516 = vmatprep.subr.mxu0 0.0
    %517 = vmatpush2.msra.mxu0 0.0
    %518 = vmatprep.subr.mxu0 0.0
    %519 = vmatpush2.msra.mxu0 0.0
    %520 = vmatprep.subr.mxu0 0.0
    %521 = vmatpush2.msra.mxu0 0.0
    %522 = vmatprep.subr.mxu0 0.0
    %523 = vmatpush2.msra.mxu0 0.0
    %524 = vmatprep.subr.mxu0 0.0
    %525 = vmatpush2.msra.mxu0 0.0
    %526 = vmatprep.subr.mxu0 0.0
    %527 = vmatpush2.msra.mxu0 0.0
    %528 = vmatprep.subr.mxu0 0.0
    %529 = vmatpush2.msra.mxu0 0.0
    %530 = vmatprep.subr.mxu0 0.0
    %531 = vmatpush2.msra.mxu0 0.0
    %532 = vmatprep.subr.mxu0 0.0
    %533 = vmatpush2.msra.mxu0 0.0
    %534 = vmatprep.mubr.f32.mxu0 0.0
    %535 = vmatmul.mubr.f32.gmra.mxu0 %v454
    %v536 = vpop.f32.mrf.mxu0
    %v537 = vadd.f32 0.0, %v536
    %v538 = vpop.f32.mrf.mxu0
    %539 = vmatprep.mubr.f32.mxu0 0.0
    %540 = vmatmul.mubr.f32.gmra.mxu0 %v455
    %v541 = vpop.f32.mrf.mxu0
    %v542 = vadd.f32 0.0, %v541
    %v543 = vpop.f32.mrf.mxu0
    %544 = vmatprep.mubr.f32.mxu0 0.0
    %545 = vmatmul.mubr.f32.gmra.mxu0 %v456
    %v546 = vpop.f32.mrf.mxu0
    %v547 = vadd.f32 0.0, %v546
    %v548 = vpop.f32.mrf.mxu0
    %549 = vmatprep.mubr.f32.mxu0 0.0
    %550 = vmatmul.mubr.f32.gmra.mxu0 %v457
    %v551 = vpop.f32.mrf.mxu0
    %v552 = vadd.f32 0.0, %v551
    %v553 = vpop.f32.mrf.mxu0
    %554 = vmatprep.mubr.f32.mxu0 0.0
    %555 = vmatmul.mubr.f32.gmra.mxu0 %v458
    %v556 = vpop.f32.mrf.mxu0
    %v557 = vadd.f32 0.0, %v556
    %v558 = vpop.f32.mrf.mxu0
    %559 = vmatprep.mubr.f32.mxu0 0.0
    %560 = vmatmul.mubr.f32.gmra.mxu0 %v459
    %v561 = vpop.f32.mrf.mxu0
    %v562 = vadd.f32 0.0, %v561
    %v563 = vpop.f32.mrf.mxu0
    %564 = vmatprep.mubr.f32.mxu0 0.0
    %565 = vmatmul.mubr.f32.gmra.mxu0 %v460
    %v566 = vpop.f32.mrf.mxu0
    %v567 = vadd.f32 0.0, %v566
    %v568 = vpop.f32.mrf.mxu0
    %569 = vmatprep.mubr.f32.mxu0 0.0
    %570 = vmatmul.mubr.f32.gmra.mxu0 %v461
    %v571 = vpop.f32.mrf.mxu0
    %v572 = vadd.f32 0.0, %v571
    %v573 = vpop.f32.mrf.mxu0
    %574 = vmatprep.mubr.f32.mxu0 0.0
    %575 = vmatmul.mubr.f32.gmra.mxu0 %v462
    %v576 = vpop.f32.mrf.mxu0
    %v577 = vadd.f32 0.0, %v576
    %v578 = vpop.f32.mrf.mxu0
    %579 = vmatprep.mubr.f32.mxu0 0.0
    %580 = vmatmul.mubr.f32.gmra.mxu0 %v463
    %v581 = vpop.f32.mrf.mxu0
    %v582 = vadd.f32 0.0, %v581
    %v583 = vpop.f32.mrf.mxu0
    %584 = vmatprep.mubr.f32.mxu0 0.0
    %585 = vmatmul.mubr.f32.gmra.mxu0 %v464
    %v586 = vpop.f32.mrf.mxu0
    %v587 = vadd.f32 0.0, %v586
    %v588 = vpop.f32.mrf.mxu0
    %589 = vmatprep.mubr.f32.mxu0 0.0
    %590 = vmatmul.mubr.f32.gmra.mxu0 %v465
    %v591 = vpop.f32.mrf.mxu0
    %v592 = vadd.f32 0.0, %v591
    %v593 = vpop.f32.mrf.mxu0
    %594 = vmatprep.mubr.f32.mxu0 0.0
    %595 = vmatmul.mubr.f32.gmra.mxu0 %v466
    %v596 = vpop.f32.mrf.mxu0
    %v597 = vadd.f32 0.0, %v596
    %v598 = vpop.f32.mrf.mxu0
    %599 = vmatprep.mubr.f32.mxu0 0.0
    %600 = vmatmul.mubr.f32.gmra.mxu0 %v467
    %v601 = vpop.f32.mrf.mxu0
    %v602 = vadd.f32 0.0, %v601
    %v603 = vpop.f32.mrf.mxu0
    %604 = vmatprep.mubr.f32.mxu0 0.0
    %605 = vmatmul.mubr.f32.gmra.mxu0 %v468
    %v606 = vpop.f32.mrf.mxu0
    %v607 = vadd.f32 0.0, %v606
    %v608 = vpop.f32.mrf.mxu0
    %609 = vmatprep.mubr.f32.mxu0 0.0
    %610 = vmatmul.mubr.f32.gmra.mxu0 %v469
    %v611 = vpop.f32.mrf.mxu0
    %v612 = vadd.f32 0.0, %v611
    %v613 = vpop.f32.mrf.mxu0
    %614 = vdwg.mxu0
    %615 = vst [vmem:[#allocation9] sm:$0xff] %v537
    %616 = vst [vmem:[#allocation9 + $0x8] sm:$0xff] %v542
    %617 = vst [vmem:[#allocation9 + $0x10] sm:$0xff] %v547
    %618 = vst [vmem:[#allocation9 + $0x18] sm:$0xff] %v552
    %619 = vst [vmem:[#allocation9 + $0x20] sm:$0xff] %v557
    %620 = vst [vmem:[#allocation9 + $0x28] sm:$0xff] %v562
    %621 = vst [vmem:[#allocation9 + $0x30] sm:$0xff] %v567
    %622 = vst [vmem:[#allocation9 + $0x38] sm:$0xff] %v572
    %623 = vst [vmem:[#allocation9 + $0x40] sm:$0xff] %v577
    %624 = vst [vmem:[#allocation9 + $0x48] sm:$0xff] %v582
    %625 = vst [vmem:[#allocation9 + $0x50] sm:$0xff] %v587
    %626 = vst [vmem:[#allocation9 + $0x58] sm:$0xff] %v592
    %627 = vst [vmem:[#allocation9 + $0x60] sm:$0xff] %v597
    %628 = vst [vmem:[#allocation9 + $0x68] sm:$0xff] %v602
    %629 = vst [vmem:[#allocation9 + $0x70] sm:$0xff] %v607
    %630 = vst [vmem:[#allocation9 + $0x78] sm:$0xff] %v612
    // Predicated region
    $region30: #{tpu_custom_call.1} parent=1 // pred_check
      _
    $region31: #{tpu_custom_call.1} parent=1 // pred_check_branch
      %632 = sbr.rel (0) target = $region33
    $region32: #{tpu_custom_call.1} parent=1 // pred_region
      %s634 = ssub.s32 16, 16
      %635 = vsyncadd [#allocation4], %s634
      %s637 = sshll.u32 [#allocation8], 4
      %s638 = int_to_ptr.vmem [resolvable:$true] %s637
      %640 = dma.vmem_to_hbm [thread:$0]  %s638, 16, %s4, [#allocation4]
    $region33: #{tpu_custom_call.1} parent=1 // pred_fallthru
      _
    // Predicated region
    $region34: #{tpu_custom_call.1} parent=1 // pred_check
      _
    $region35: #{tpu_custom_call.1} parent=1 // pred_check_branch
      %642 = sbr.rel (0) target = $region37
    $region36: #{tpu_custom_call.1} parent=1 // pred_region
      %s644 = ssub.s32 2048, 2048
      %645 = vsyncadd [#allocation10], %s644
      %s646 = sshll.u32 [#allocation9], 4
      %s647 = int_to_ptr.vmem [resolvable:$true] %s646
      %652 = dma.vmem_to_hbm [thread:$0]  %s647, 2048, %s5, [#allocation10], 128, 128, 8
    $region37: #{tpu_custom_call.1} parent=1 // pred_fallthru
      _
    // Predicated region
    $region38: #{tpu_custom_call.1} parent=1 // pred_check
      _
    $region39: #{tpu_custom_call.1} parent=1 // pred_check_branch
      %654 = sbr.rel (0) target = $region41
    $region40: #{tpu_custom_call.1} parent=1 // pred_region
      %655 = dma.done [#allocation4], 16
    $region41: #{tpu_custom_call.1} parent=1 // pred_fallthru
      _
    // Predicated region
    $region42: #{tpu_custom_call.1} parent=1 // pred_check
      _
    $region43: #{tpu_custom_call.1} parent=1 // pred_check_branch
      %657 = sbr.rel (0) target = $region45
    $region44: #{tpu_custom_call.1} parent=1 // pred_region
      %658 = dma.done [#allocation10], 2048
    $region45: #{tpu_custom_call.1} parent=1 // pred_fallthru
      _
    %659 = vsyncpa [#allocation3], 1
    %660 = vsyncpa [#allocation6], 1
    %661 = vsyncpa [#allocation4], 1
    %662 = vsyncpa [#allocation10], 1

</llo_original>
